<compile_context>
chip_gen: v7x
topology: tpu7x:2x2x1
jax: 0.10.0
libtpu: 0.0.40
codegen_flags: <defaults>
</compile_context>

<pallas_src>
import functools

import jax
import jax.numpy as jnp
from jax import lax
from jax.experimental import pallas as pl
from jax.experimental.pallas import tpu as pltpu


def _lstm_kernel(x_ref, w_in_ref, w_hh_ref, w_lin_ref, out_ref, *, T, B, H):
    # x_ref:     (T*B, Ia)  time-major rows (t*B + b); col I is 1.0 (bias), rest 0-pad
    # w_in_ref:  (Ia, 4H)   rows [0:I] = W_ih^T, row I = (b_ih+b_hh), rest 0;
    #                       i/f/o columns pre-scaled by 0.5 (sigmoid-via-tanh trick)
    # w_hh_ref:  (H, 4H)    bf16, W_hh^T with the same 0.5 column scaling
    # w_lin_ref: (H+1, O)   rows [0:H] = W_lin^T, row H = b_lin
    # out_ref:   (B, O)
    w_hh = w_hh_ref[...]                       # (H, 4H) bf16, hoisted out of the loop

    # Hoisted input projection (bias folded in via the ones column): one MXU
    # matmul for ALL timesteps, off the serial h->h dependency chain.
    xproj = jnp.dot(x_ref[...], w_in_ref[...],
                    preferred_element_type=jnp.float32)      # (T*B, 4H)

    # Lane mask selecting the "g" gate block (PyTorch gate order [i, f, g, o]).
    lane = lax.broadcasted_iota(jnp.int32, (B, 4 * H), 1)
    g_mask = (lane >= 2 * H) & (lane < 3 * H)

    h = jnp.zeros((B, H), jnp.float32)
    c = jnp.zeros((B, H), jnp.float32)

    # T is small and static: full unroll so the scheduler can overlap the
    # (independent) xproj slices and EUP activations with the recurrent MXU ops.
    for t in range(T):
        g_x = xproj[t * B:(t + 1) * B, :]                    # (B, 4H), aligned
        if t == 0:
            gates = g_x                                      # h0 == 0 -> skip h @ W_hh
        else:
            # Single-pass bf16 MXU matmul on the serial chain; f32 accumulate.
            gates = g_x + jnp.dot(h.astype(jnp.bfloat16), w_hh,
                                  preferred_element_type=jnp.float32)
        # One EUP pass: i/f/o columns were pre-scaled by 0.5, so
        # sigmoid(z) == 0.5*tanh(z/2) + 0.5; g column uses tanh directly.
        th = jnp.tanh(gates)
        act = jnp.where(g_mask, th, 0.5 * th + 0.5)
        i_g = act[:, 0 * H:1 * H]
        f_g = act[:, 1 * H:2 * H]
        g_g = act[:, 2 * H:3 * H]
        o_g = act[:, 3 * H:4 * H]
        c = f_g * c + i_g * g_g
        h = o_g * jnp.tanh(c)

    # Final linear on the last hidden state; bias row folded into the same slab.
    out_ref[...] = (
        jnp.dot(h, w_lin_ref[0:H, :], preferred_element_type=jnp.float32)
        + w_lin_ref[H:H + 1, :]
    )


def lstm_model_forward(x_btI, w_ih, w_hh, b_ih, b_hh, w_lin, b_lin):
    """x_btI: (B, T, I) batch-first. Returns (B, O) = linear(last hidden)."""
    B, T, I = x_btI.shape
    H = w_hh.shape[1]
    O = w_lin.shape[0]

    # Pad batch to a multiple of 8 (sublane width): every per-step slab becomes
    # a full, aligned vreg slice. Padding rows are discarded at the end.
    Bp = ((B + 7) // 8) * 8
    x_pad = x_btI.astype(jnp.float32)
    if Bp != B:
        x_pad = jnp.pad(x_pad, ((0, Bp - B), (0, 0), (0, 0)))

    # Augmented input width: I real columns + 1 ones column (bias), rounded up
    # to a multiple of 8 so the weight slab rows stay sublane-aligned.
    Ia = ((I + 1 + 7) // 8) * 8

    # Layout plumbing done once in the wrapper (XLA side, not in the kernel).
    x_tb = jnp.transpose(x_pad, (1, 0, 2)).reshape(T * Bp, I)              # (T*Bp, I)
    x_aug = jnp.concatenate(
        [x_tb,
         jnp.ones((T * Bp, 1), jnp.float32),
         jnp.zeros((T * Bp, Ia - I - 1), jnp.float32)], axis=1)            # (T*Bp, Ia)

    # 0.5x scale on the i/f/o gate columns (sigmoid via tanh); g columns keep 1.0.
    scale = jnp.concatenate(
        [jnp.full((2 * H,), 0.5), jnp.ones((H,)), jnp.full((H,), 0.5)]
    ).astype(jnp.float32)                                                   # (4H,)

    w_ih_t = jnp.transpose(w_ih).astype(jnp.float32) * scale[None, :]       # (I, 4H)
    b_row = ((b_ih + b_hh).astype(jnp.float32) * scale).reshape(1, 4 * H)   # (1, 4H)
    w_in_aug = jnp.concatenate(
        [w_ih_t, b_row, jnp.zeros((Ia - I - 1, 4 * H), jnp.float32)], axis=0)  # (Ia, 4H)

    # Recurrent weights in bf16 (single-pass MXU); 0.5 scale is exact in bf16.
    w_hh_t = (jnp.transpose(w_hh).astype(jnp.float32) * scale[None, :]
              ).astype(jnp.bfloat16)                                        # (H, 4H)

    w_lin_cat = jnp.concatenate(
        [jnp.transpose(w_lin), b_lin.reshape(1, O)], axis=0
    ).astype(jnp.float32)                                                   # (H+1, O)

    vmem = pl.BlockSpec(memory_space=pltpu.MemorySpace.VMEM)
    kernel = functools.partial(_lstm_kernel, T=T, B=Bp, H=H)
    out = pl.pallas_call(
        kernel,
        out_shape=jax.ShapeDtypeStruct((Bp, O), jnp.float32),
        in_specs=[vmem, vmem, vmem, vmem],
        out_specs=vmem,
    )(x_aug, w_in_aug, w_hh_t, w_lin_cat)
    return out[:B]


def _reference(x_btI, w_ih, w_hh, b_ih, b_hh, w_lin, b_lin):
    """Pure-JAX reference matching torch.nn.LSTM (batch_first) semantics."""
    B, T, I = x_btI.shape
    H = w_hh.shape[1]
    h = jnp.zeros((B, H), jnp.float32)
    c = jnp.zeros((B, H), jnp.float32)
    for t in range(T):
        g = x_btI[:, t] @ w_ih.T + b_ih + h @ w_hh.T + b_hh
        i_g = jax.nn.sigmoid(g[:, 0 * H:1 * H])
        f_g = jax.nn.sigmoid(g[:, 1 * H:2 * H])
        g_g = jnp.tanh(g[:, 2 * H:3 * H])
        o_g = jax.nn.sigmoid(g[:, 3 * H:4 * H])
        c = f_g * c + i_g * g_g
        h = o_g * jnp.tanh(c)
    return h @ w_lin.T + b_lin


if __name__ == "__main__":
    # Small shapes consistent with the module: batch=4, seq=8, input=8,
    # hidden=32 (so 4H = 128 lanes), output=1.
    B, T, I, H, O = 4, 8, 8, 32, 1

    key = jax.random.PRNGKey(0)
    ks = jax.random.split(key, 7)
    bound = 1.0 / jnp.sqrt(H)

    x = jax.random.normal(ks[0], (B, T, I), dtype=jnp.float32)
    w_ih = jax.random.uniform(ks[1], (4 * H, I), minval=-bound, maxval=bound)
    w_hh = jax.random.uniform(ks[2], (4 * H, H), minval=-bound, maxval=bound)
    b_ih = jax.random.uniform(ks[3], (4 * H,), minval=-bound, maxval=bound)
    b_hh = jax.random.uniform(ks[4], (4 * H,), minval=-bound, maxval=bound)
    w_lin = jax.random.uniform(ks[5], (O, H), minval=-bound, maxval=bound)
    b_lin = jax.random.uniform(ks[6], (O,), minval=-bound, maxval=bound)

    out = lstm_model_forward(x, w_ih, w_hh, b_ih, b_hh, w_lin, b_lin)
    out = jax.block_until_ready(out)

    ref = _reference(x, w_ih, w_hh, b_ih, b_hh, w_lin, b_lin)
    assert out.shape == (B, O)
    # bf16 operands on the recurrent matmul (f32 accumulation/state): expect
    # ~1e-3..1e-2 absolute error vs the exact f32 reference.
    assert jnp.max(jnp.abs(out - ref)) < 5e-2, "mismatch vs reference"

    print("KERNEL_OK")
</pallas_src>

<mosaic_0001>
module attributes {stable_mosaic.version = 11 : i64} {
  func.func @_lstm_kernel(%arg0: memref<64x16xf32, #tpu.memory_space<vmem>>, %arg1: memref<16x128xf32, #tpu.memory_space<vmem>>, %arg2: memref<32x128xbf16, #tpu.memory_space<vmem>>, %arg3: memref<33x1xf32, #tpu.memory_space<vmem>>, %arg4: memref<8x1xf32, #tpu.memory_space<vmem>>) attributes {dimension_semantics = [], scalar_prefetch = 0 : i64, scratch_operands = 0 : i64, tpu.core_type = #tpu.core_type<tc>} {
    %c0 = arith.constant 0 : index
    %c0_0 = arith.constant 0 : index
    %0 = vector.load %arg2[%c0, %c0_0] : memref<32x128xbf16, #tpu.memory_space<vmem>>, vector<32x128xbf16>
    %c0_1 = arith.constant 0 : index
    %c0_2 = arith.constant 0 : index
    %1 = vector.load %arg0[%c0_1, %c0_2] : memref<64x16xf32, #tpu.memory_space<vmem>>, vector<64x16xf32>
    %c0_3 = arith.constant 0 : index
    %c0_4 = arith.constant 0 : index
    %2 = vector.load %arg1[%c0_3, %c0_4] : memref<16x128xf32, #tpu.memory_space<vmem>>, vector<16x128xf32>
    %cst = arith.constant dense<0.000000e+00> : vector<64x128xf32>
    %3 = tpu.matmul %1, %2, %cst {dimension_numbers = #tpu.dot_dimension_numbers<[1], [0], [0], [1], [0, 0, 1, 1], [], []>} : vector<64x16xf32>, vector<16x128xf32>, vector<64x128xf32> -> vector<64x128xf32>
    %4 = tpu.iota {dimensions = array<i32: 1>} : vector<8x128xi32>
    %c64_i32 = arith.constant 64 : i32
    %5 = vector.broadcast %c64_i32 : i32 to vector<8x128xi32>
    %6 = arith.cmpi sge, %4, %5 : vector<8x128xi32>
    %c96_i32 = arith.constant 96 : i32
    %7 = vector.broadcast %c96_i32 : i32 to vector<8x128xi32>
    %8 = arith.cmpi slt, %4, %7 : vector<8x128xi32>
    %9 = arith.andi %6, %8 : vector<8x128xi1>
    %cst_5 = arith.constant 0.000000e+00 : f32
    %10 = vector.broadcast %cst_5 : f32 to vector<8x32xf32>
    %11 = vector.extract_strided_slice %3 {offsets = [0, 0], sizes = [8, 128], strides = [1, 1]} : vector<64x128xf32> to vector<8x128xf32>
    %12 = math.tanh %11 : vector<8x128xf32>
    %cst_6 = arith.constant 5.000000e-01 : f32
    %13 = vector.broadcast %cst_6 : f32 to vector<8x128xf32>
    %14 = arith.mulf %13, %12 : vector<8x128xf32>
    %cst_7 = arith.constant 5.000000e-01 : f32
    %15 = vector.broadcast %cst_7 : f32 to vector<8x128xf32>
    %16 = arith.addf %14, %15 : vector<8x128xf32>
    %17 = arith.select %9, %12, %16 : vector<8x128xi1>, vector<8x128xf32>
    %18 = vector.extract_strided_slice %17 {offsets = [0, 0], sizes = [8, 32], strides = [1, 1]} : vector<8x128xf32> to vector<8x32xf32>
    %19 = vector.extract_strided_slice %17 {offsets = [0, 32], sizes = [8, 32], strides = [1, 1]} : vector<8x128xf32> to vector<8x32xf32>
    %20 = vector.extract_strided_slice %17 {offsets = [0, 64], sizes = [8, 32], strides = [1, 1]} : vector<8x128xf32> to vector<8x32xf32>
    %21 = vector.extract_strided_slice %17 {offsets = [0, 96], sizes = [8, 32], strides = [1, 1]} : vector<8x128xf32> to vector<8x32xf32>
    %22 = arith.mulf %19, %10 : vector<8x32xf32>
    %23 = arith.mulf %18, %20 : vector<8x32xf32>
    %24 = arith.addf %22, %23 : vector<8x32xf32>
    %25 = math.tanh %24 : vector<8x32xf32>
    %26 = arith.mulf %21, %25 : vector<8x32xf32>
    %27 = vector.extract_strided_slice %3 {offsets = [8, 0], sizes = [8, 128], strides = [1, 1]} : vector<64x128xf32> to vector<8x128xf32>
    %28 = arith.truncf %26 : vector<8x32xf32> to vector<8x32xbf16>
    %cst_8 = arith.constant dense<0.000000e+00> : vector<8x128xf32>
    %29 = tpu.matmul %28, %0, %cst_8 {dimension_numbers = #tpu.dot_dimension_numbers<[1], [0], [0], [1], [0, 0, 1, 1], [], []>} : vector<8x32xbf16>, vector<32x128xbf16>, vector<8x128xf32> -> vector<8x128xf32>
    %30 = arith.addf %27, %29 : vector<8x128xf32>
    %31 = math.tanh %30 : vector<8x128xf32>
    %cst_9 = arith.constant 5.000000e-01 : f32
    %32 = vector.broadcast %cst_9 : f32 to vector<8x128xf32>
    %33 = arith.mulf %32, %31 : vector<8x128xf32>
    %cst_10 = arith.constant 5.000000e-01 : f32
    %34 = vector.broadcast %cst_10 : f32 to vector<8x128xf32>
    %35 = arith.addf %33, %34 : vector<8x128xf32>
    %36 = arith.select %9, %31, %35 : vector<8x128xi1>, vector<8x128xf32>
    %37 = vector.extract_strided_slice %36 {offsets = [0, 0], sizes = [8, 32], strides = [1, 1]} : vector<8x128xf32> to vector<8x32xf32>
    %38 = vector.extract_strided_slice %36 {offsets = [0, 32], sizes = [8, 32], strides = [1, 1]} : vector<8x128xf32> to vector<8x32xf32>
    %39 = vector.extract_strided_slice %36 {offsets = [0, 64], sizes = [8, 32], strides = [1, 1]} : vector<8x128xf32> to vector<8x32xf32>
    %40 = vector.extract_strided_slice %36 {offsets = [0, 96], sizes = [8, 32], strides = [1, 1]} : vector<8x128xf32> to vector<8x32xf32>
    %41 = arith.mulf %38, %24 : vector<8x32xf32>
    %42 = arith.mulf %37, %39 : vector<8x32xf32>
    %43 = arith.addf %41, %42 : vector<8x32xf32>
    %44 = math.tanh %43 : vector<8x32xf32>
    %45 = arith.mulf %40, %44 : vector<8x32xf32>
    %46 = vector.extract_strided_slice %3 {offsets = [16, 0], sizes = [8, 128], strides = [1, 1]} : vector<64x128xf32> to vector<8x128xf32>
    %47 = arith.truncf %45 : vector<8x32xf32> to vector<8x32xbf16>
    %cst_11 = arith.constant dense<0.000000e+00> : vector<8x128xf32>
    %48 = tpu.matmul %47, %0, %cst_11 {dimension_numbers = #tpu.dot_dimension_numbers<[1], [0], [0], [1], [0, 0, 1, 1], [], []>} : vector<8x32xbf16>, vector<32x128xbf16>, vector<8x128xf32> -> vector<8x128xf32>
    %49 = arith.addf %46, %48 : vector<8x128xf32>
    %50 = math.tanh %49 : vector<8x128xf32>
    %cst_12 = arith.constant 5.000000e-01 : f32
    %51 = vector.broadcast %cst_12 : f32 to vector<8x128xf32>
    %52 = arith.mulf %51, %50 : vector<8x128xf32>
    %cst_13 = arith.constant 5.000000e-01 : f32
    %53 = vector.broadcast %cst_13 : f32 to vector<8x128xf32>
    %54 = arith.addf %52, %53 : vector<8x128xf32>
    %55 = arith.select %9, %50, %54 : vector<8x128xi1>, vector<8x128xf32>
    %56 = vector.extract_strided_slice %55 {offsets = [0, 0], sizes = [8, 32], strides = [1, 1]} : vector<8x128xf32> to vector<8x32xf32>
    %57 = vector.extract_strided_slice %55 {offsets = [0, 32], sizes = [8, 32], strides = [1, 1]} : vector<8x128xf32> to vector<8x32xf32>
    %58 = vector.extract_strided_slice %55 {offsets = [0, 64], sizes = [8, 32], strides = [1, 1]} : vector<8x128xf32> to vector<8x32xf32>
    %59 = vector.extract_strided_slice %55 {offsets = [0, 96], sizes = [8, 32], strides = [1, 1]} : vector<8x128xf32> to vector<8x32xf32>
    %60 = arith.mulf %57, %43 : vector<8x32xf32>
    %61 = arith.mulf %56, %58 : vector<8x32xf32>
    %62 = arith.addf %60, %61 : vector<8x32xf32>
    %63 = math.tanh %62 : vector<8x32xf32>
    %64 = arith.mulf %59, %63 : vector<8x32xf32>
    %65 = vector.extract_strided_slice %3 {offsets = [24, 0], sizes = [8, 128], strides = [1, 1]} : vector<64x128xf32> to vector<8x128xf32>
    %66 = arith.truncf %64 : vector<8x32xf32> to vector<8x32xbf16>
    %cst_14 = arith.constant dense<0.000000e+00> : vector<8x128xf32>
    %67 = tpu.matmul %66, %0, %cst_14 {dimension_numbers = #tpu.dot_dimension_numbers<[1], [0], [0], [1], [0, 0, 1, 1], [], []>} : vector<8x32xbf16>, vector<32x128xbf16>, vector<8x128xf32> -> vector<8x128xf32>
    %68 = arith.addf %65, %67 : vector<8x128xf32>
    %69 = math.tanh %68 : vector<8x128xf32>
    %cst_15 = arith.constant 5.000000e-01 : f32
    %70 = vector.broadcast %cst_15 : f32 to vector<8x128xf32>
    %71 = arith.mulf %70, %69 : vector<8x128xf32>
    %cst_16 = arith.constant 5.000000e-01 : f32
    %72 = vector.broadcast %cst_16 : f32 to vector<8x128xf32>
    %73 = arith.addf %71, %72 : vector<8x128xf32>
    %74 = arith.select %9, %69, %73 : vector<8x128xi1>, vector<8x128xf32>
    %75 = vector.extract_strided_slice %74 {offsets = [0, 0], sizes = [8, 32], strides = [1, 1]} : vector<8x128xf32> to vector<8x32xf32>
    %76 = vector.extract_strided_slice %74 {offsets = [0, 32], sizes = [8, 32], strides = [1, 1]} : vector<8x128xf32> to vector<8x32xf32>
    %77 = vector.extract_strided_slice %74 {offsets = [0, 64], sizes = [8, 32], strides = [1, 1]} : vector<8x128xf32> to vector<8x32xf32>
    %78 = vector.extract_strided_slice %74 {offsets = [0, 96], sizes = [8, 32], strides = [1, 1]} : vector<8x128xf32> to vector<8x32xf32>
    %79 = arith.mulf %76, %62 : vector<8x32xf32>
    %80 = arith.mulf %75, %77 : vector<8x32xf32>
    %81 = arith.addf %79, %80 : vector<8x32xf32>
    %82 = math.tanh %81 : vector<8x32xf32>
    %83 = arith.mulf %78, %82 : vector<8x32xf32>
    %84 = vector.extract_strided_slice %3 {offsets = [32, 0], sizes = [8, 128], strides = [1, 1]} : vector<64x128xf32> to vector<8x128xf32>
    %85 = arith.truncf %83 : vector<8x32xf32> to vector<8x32xbf16>
    %cst_17 = arith.constant dense<0.000000e+00> : vector<8x128xf32>
    %86 = tpu.matmul %85, %0, %cst_17 {dimension_numbers = #tpu.dot_dimension_numbers<[1], [0], [0], [1], [0, 0, 1, 1], [], []>} : vector<8x32xbf16>, vector<32x128xbf16>, vector<8x128xf32> -> vector<8x128xf32>
    %87 = arith.addf %84, %86 : vector<8x128xf32>
    %88 = math.tanh %87 : vector<8x128xf32>
    %cst_18 = arith.constant 5.000000e-01 : f32
    %89 = vector.broadcast %cst_18 : f32 to vector<8x128xf32>
    %90 = arith.mulf %89, %88 : vector<8x128xf32>
    %cst_19 = arith.constant 5.000000e-01 : f32
    %91 = vector.broadcast %cst_19 : f32 to vector<8x128xf32>
    %92 = arith.addf %90, %91 : vector<8x128xf32>
    %93 = arith.select %9, %88, %92 : vector<8x128xi1>, vector<8x128xf32>
    %94 = vector.extract_strided_slice %93 {offsets = [0, 0], sizes = [8, 32], strides = [1, 1]} : vector<8x128xf32> to vector<8x32xf32>
    %95 = vector.extract_strided_slice %93 {offsets = [0, 32], sizes = [8, 32], strides = [1, 1]} : vector<8x128xf32> to vector<8x32xf32>
    %96 = vector.extract_strided_slice %93 {offsets = [0, 64], sizes = [8, 32], strides = [1, 1]} : vector<8x128xf32> to vector<8x32xf32>
    %97 = vector.extract_strided_slice %93 {offsets = [0, 96], sizes = [8, 32], strides = [1, 1]} : vector<8x128xf32> to vector<8x32xf32>
    %98 = arith.mulf %95, %81 : vector<8x32xf32>
    %99 = arith.mulf %94, %96 : vector<8x32xf32>
    %100 = arith.addf %98, %99 : vector<8x32xf32>
    %101 = math.tanh %100 : vector<8x32xf32>
    %102 = arith.mulf %97, %101 : vector<8x32xf32>
    %103 = vector.extract_strided_slice %3 {offsets = [40, 0], sizes = [8, 128], strides = [1, 1]} : vector<64x128xf32> to vector<8x128xf32>
    %104 = arith.truncf %102 : vector<8x32xf32> to vector<8x32xbf16>
    %cst_20 = arith.constant dense<0.000000e+00> : vector<8x128xf32>
    %105 = tpu.matmul %104, %0, %cst_20 {dimension_numbers = #tpu.dot_dimension_numbers<[1], [0], [0], [1], [0, 0, 1, 1], [], []>} : vector<8x32xbf16>, vector<32x128xbf16>, vector<8x128xf32> -> vector<8x128xf32>
    %106 = arith.addf %103, %105 : vector<8x128xf32>
    %107 = math.tanh %106 : vector<8x128xf32>
    %cst_21 = arith.constant 5.000000e-01 : f32
    %108 = vector.broadcast %cst_21 : f32 to vector<8x128xf32>
    %109 = arith.mulf %108, %107 : vector<8x128xf32>
    %cst_22 = arith.constant 5.000000e-01 : f32
    %110 = vector.broadcast %cst_22 : f32 to vector<8x128xf32>
    %111 = arith.addf %109, %110 : vector<8x128xf32>
    %112 = arith.select %9, %107, %111 : vector<8x128xi1>, vector<8x128xf32>
    %113 = vector.extract_strided_slice %112 {offsets = [0, 0], sizes = [8, 32], strides = [1, 1]} : vector<8x128xf32> to vector<8x32xf32>
    %114 = vector.extract_strided_slice %112 {offsets = [0, 32], sizes = [8, 32], strides = [1, 1]} : vector<8x128xf32> to vector<8x32xf32>
    %115 = vector.extract_strided_slice %112 {offsets = [0, 64], sizes = [8, 32], strides = [1, 1]} : vector<8x128xf32> to vector<8x32xf32>
    %116 = vector.extract_strided_slice %112 {offsets = [0, 96], sizes = [8, 32], strides = [1, 1]} : vector<8x128xf32> to vector<8x32xf32>
    %117 = arith.mulf %114, %100 : vector<8x32xf32>
    %118 = arith.mulf %113, %115 : vector<8x32xf32>
    %119 = arith.addf %117, %118 : vector<8x32xf32>
    %120 = math.tanh %119 : vector<8x32xf32>
    %121 = arith.mulf %116, %120 : vector<8x32xf32>
    %122 = vector.extract_strided_slice %3 {offsets = [48, 0], sizes = [8, 128], strides = [1, 1]} : vector<64x128xf32> to vector<8x128xf32>
    %123 = arith.truncf %121 : vector<8x32xf32> to vector<8x32xbf16>
    %cst_23 = arith.constant dense<0.000000e+00> : vector<8x128xf32>
    %124 = tpu.matmul %123, %0, %cst_23 {dimension_numbers = #tpu.dot_dimension_numbers<[1], [0], [0], [1], [0, 0, 1, 1], [], []>} : vector<8x32xbf16>, vector<32x128xbf16>, vector<8x128xf32> -> vector<8x128xf32>
    %125 = arith.addf %122, %124 : vector<8x128xf32>
    %126 = math.tanh %125 : vector<8x128xf32>
    %cst_24 = arith.constant 5.000000e-01 : f32
    %127 = vector.broadcast %cst_24 : f32 to vector<8x128xf32>
    %128 = arith.mulf %127, %126 : vector<8x128xf32>
    %cst_25 = arith.constant 5.000000e-01 : f32
    %129 = vector.broadcast %cst_25 : f32 to vector<8x128xf32>
    %130 = arith.addf %128, %129 : vector<8x128xf32>
    %131 = arith.select %9, %126, %130 : vector<8x128xi1>, vector<8x128xf32>
    %132 = vector.extract_strided_slice %131 {offsets = [0, 0], sizes = [8, 32], strides = [1, 1]} : vector<8x128xf32> to vector<8x32xf32>
    %133 = vector.extract_strided_slice %131 {offsets = [0, 32], sizes = [8, 32], strides = [1, 1]} : vector<8x128xf32> to vector<8x32xf32>
    %134 = vector.extract_strided_slice %131 {offsets = [0, 64], sizes = [8, 32], strides = [1, 1]} : vector<8x128xf32> to vector<8x32xf32>
    %135 = vector.extract_strided_slice %131 {offsets = [0, 96], sizes = [8, 32], strides = [1, 1]} : vector<8x128xf32> to vector<8x32xf32>
    %136 = arith.mulf %133, %119 : vector<8x32xf32>
    %137 = arith.mulf %132, %134 : vector<8x32xf32>
    %138 = arith.addf %136, %137 : vector<8x32xf32>
    %139 = math.tanh %138 : vector<8x32xf32>
    %140 = arith.mulf %135, %139 : vector<8x32xf32>
    %141 = vector.extract_strided_slice %3 {offsets = [56, 0], sizes = [8, 128], strides = [1, 1]} : vector<64x128xf32> to vector<8x128xf32>
    %142 = arith.truncf %140 : vector<8x32xf32> to vector<8x32xbf16>
    %cst_26 = arith.constant dense<0.000000e+00> : vector<8x128xf32>
    %143 = tpu.matmul %142, %0, %cst_26 {dimension_numbers = #tpu.dot_dimension_numbers<[1], [0], [0], [1], [0, 0, 1, 1], [], []>} : vector<8x32xbf16>, vector<32x128xbf16>, vector<8x128xf32> -> vector<8x128xf32>
    %144 = arith.addf %141, %143 : vector<8x128xf32>
    %145 = math.tanh %144 : vector<8x128xf32>
    %cst_27 = arith.constant 5.000000e-01 : f32
    %146 = vector.broadcast %cst_27 : f32 to vector<8x128xf32>
    %147 = arith.mulf %146, %145 : vector<8x128xf32>
    %cst_28 = arith.constant 5.000000e-01 : f32
    %148 = vector.broadcast %cst_28 : f32 to vector<8x128xf32>
    %149 = arith.addf %147, %148 : vector<8x128xf32>
    %150 = arith.select %9, %145, %149 : vector<8x128xi1>, vector<8x128xf32>
    %151 = vector.extract_strided_slice %150 {offsets = [0, 0], sizes = [8, 32], strides = [1, 1]} : vector<8x128xf32> to vector<8x32xf32>
    %152 = vector.extract_strided_slice %150 {offsets = [0, 32], sizes = [8, 32], strides = [1, 1]} : vector<8x128xf32> to vector<8x32xf32>
    %153 = vector.extract_strided_slice %150 {offsets = [0, 64], sizes = [8, 32], strides = [1, 1]} : vector<8x128xf32> to vector<8x32xf32>
    %154 = vector.extract_strided_slice %150 {offsets = [0, 96], sizes = [8, 32], strides = [1, 1]} : vector<8x128xf32> to vector<8x32xf32>
    %155 = arith.mulf %152, %138 : vector<8x32xf32>
    %156 = arith.mulf %151, %153 : vector<8x32xf32>
    %157 = arith.addf %155, %156 : vector<8x32xf32>
    %158 = math.tanh %157 : vector<8x32xf32>
    %159 = arith.mulf %154, %158 : vector<8x32xf32>
    %c0_29 = arith.constant 0 : index
    %c0_30 = arith.constant 0 : index
    %160 = vector.load %arg3[%c0_29, %c0_30] : memref<33x1xf32, #tpu.memory_space<vmem>>, vector<32x1xf32>
    %cst_31 = arith.constant dense<0.000000e+00> : vector<8x1xf32>
    %161 = tpu.matmul %159, %160, %cst_31 {dimension_numbers = #tpu.dot_dimension_numbers<[1], [0], [0], [1], [0, 0, 1, 1], [], []>} : vector<8x32xf32>, vector<32x1xf32>, vector<8x1xf32> -> vector<8x1xf32>
    %c32 = arith.constant 32 : index
    %c0_32 = arith.constant 0 : index
    %162 = vector.load %arg3[%c32, %c0_32] : memref<33x1xf32, #tpu.memory_space<vmem>>, vector<1x1xf32>
    %163 = vector.broadcast %162 : vector<1x1xf32> to vector<8x1xf32>
    %164 = arith.addf %161, %163 : vector<8x1xf32>
    %c0_33 = arith.constant 0 : index
    %c0_34 = arith.constant 0 : index
    %165 = vector.load %arg4[%c0_33, %c0_34] : memref<8x1xf32, #tpu.memory_space<vmem>>, vector<8x1xf32>
    tpu.vector_store %arg4[%c0_33, %c0_34], %164 {strides = array<i32>} : memref<8x1xf32, #tpu.memory_space<vmem>>, vector<8x1xf32>,
    return
  }
}

</mosaic_0001>

<llo_original>
// kernel: tpu_custom_call.1
$region0: #{tpu_custom_call.1}
  #allocation0 [shape = 'u32[]', space=smem, size = 0x4, offset = 0x4, fixed_abs, tag = 'smem constant byte address 0x4 - core index']
  #allocation1 [shape = 'u32[144,128]{1,0:T(1,128)}', space=vmem, size = 0x12000, scoped, tag = 'internal scratch']
  %s0 = inlined_call_operand.vmem [shape: f32[64,16], index: 0, kind: input, shape index: {}]
  %s1 = inlined_call_operand.vmem [shape: f32[16,128], index: 1, kind: input, shape index: {}]
  %s2 = inlined_call_operand.vmem [shape: bf16[32,128], index: 2, kind: input, shape index: {}]
  %s3 = inlined_call_operand.vmem [shape: f32[33,1], index: 3, kind: input, shape index: {}]
  %s4 = inlined_call_operand.vmem [shape: f32[8,1], index: 4, kind: output, shape index: {}]
  %s5 = sld [smem:[#allocation0]]
  $region26: #{tpu_custom_call.1} parent=0
    _
  %s7 = ssub.s32 1, %s5
  %s8 = scalar_select 0, %s7, %s5
  // Predicated region
  $region2: #{tpu_custom_call.1} parent=0 // pred_check
    _
  $region3: #{tpu_custom_call.1} parent=0 // pred_check_branch
    %10 = sbr.rel (0) target = $region5
  $region4: #{tpu_custom_call.1} parent=0 // pred_region
    _
  $region5: #{tpu_custom_call.1} parent=0 // pred_fallthru
    _
  // Predicated region
  $region6: #{tpu_custom_call.1} parent=0 // pred_check
    _
  $region7: #{tpu_custom_call.1} parent=0 // pred_check_branch
    %12 = sbr.rel (0) target = $region9
  $region8: #{tpu_custom_call.1} parent=0 // pred_region
    _
  $region9: #{tpu_custom_call.1} parent=0 // pred_fallthru
    _
  // Predicated region
  $region10: #{tpu_custom_call.1} parent=0 // pred_check
    _
  $region11: #{tpu_custom_call.1} parent=0 // pred_check_branch
    %14 = sbr.rel (0) target = $region13
  $region12: #{tpu_custom_call.1} parent=0 // pred_region
    _
  $region13: #{tpu_custom_call.1} parent=0 // pred_fallthru
    _
  // Predicated region
  $region14: #{tpu_custom_call.1} parent=0 // pred_check
    _
  $region15: #{tpu_custom_call.1} parent=0 // pred_check_branch
    %16 = sbr.rel (0) target = $region17
  $region16: #{tpu_custom_call.1} parent=0 // pred_region
    _
  $region17: #{tpu_custom_call.1} parent=0 // pred_fallthru
    _
  %v18 = vld [vmem:[%s2] sm:$0xf]
  %v19 = vld [vmem:[%s2 + $0x4] sm:$0xf]
  %v20 = vld [vmem:[%s2 + $0x8] sm:$0xf]
  %v21 = vld [vmem:[%s2 + $0xc] sm:$0xf]
  %v22 = vld [vmem:[%s0] sm:$0xff]
  %v23 = vld [vmem:[%s0 + $0x8] sm:$0xff]
  %v24 = vld [vmem:[%s0 + $0x10] sm:$0xff]
  %v25 = vld [vmem:[%s0 + $0x18] sm:$0xff]
  %v26 = vld [vmem:[%s0 + $0x20] sm:$0xff]
  %v27 = vld [vmem:[%s0 + $0x28] sm:$0xff]
  %v28 = vld [vmem:[%s0 + $0x30] sm:$0xff]
  %v29 = vld [vmem:[%s0 + $0x38] sm:$0xff]
  %v30 = vld [vmem:[%s1] sm:$0xff]
  %v31 = vld [vmem:[%s1 + $0x8] sm:$0xff]
  %vm32 = vcmask 130048
  %v34 = vsel %vm32, %v22, 0
  %v37 = vsel %vm32, %v23, 0
  %v40 = vsel %vm32, %v24, 0
  %v43 = vsel %vm32, %v25, 0
  %v46 = vsel %vm32, %v26, 0
  %v49 = vsel %vm32, %v27, 0
  %v52 = vsel %vm32, %v28, 0
  %v55 = vsel %vm32, %v29, 0
  %57 = vmatprep.subr.mxu0 0.0
  %58 = vmatpush1.msra.mxu0 %v30
  %59 = vmatprep.subr.mxu0 0.0
  %60 = vmatpush1.msra.mxu0 %v31
  %61 = vmatprep.subr.mxu0 0.0
  %62 = vmatpush1.msra.mxu0 0.0
  %63 = vmatprep.subr.mxu0 0.0
  %64 = vmatpush1.msra.mxu0 0.0
  %65 = vmatprep.subr.mxu0 0.0
  %66 = vmatpush1.msra.mxu0 0.0
  %67 = vmatprep.subr.mxu0 0.0
  %68 = vmatpush1.msra.mxu0 0.0
  %69 = vmatprep.subr.mxu0 0.0
  %70 = vmatpush1.msra.mxu0 0.0
  %71 = vmatprep.subr.mxu0 0.0
  %72 = vmatpush1.msra.mxu0 0.0
  %73 = vmatprep.subr.mxu0 0.0
  %74 = vmatpush1.msra.mxu0 0.0
  %75 = vmatprep.subr.mxu0 0.0
  %76 = vmatpush1.msra.mxu0 0.0
  %77 = vmatprep.subr.mxu0 0.0
  %78 = vmatpush1.msra.mxu0 0.0
  %79 = vmatprep.subr.mxu0 0.0
  %80 = vmatpush1.msra.mxu0 0.0
  %81 = vmatprep.subr.mxu0 0.0
  %82 = vmatpush1.msra.mxu0 0.0
  %83 = vmatprep.subr.mxu0 0.0
  %84 = vmatpush1.msra.mxu0 0.0
  %85 = vmatprep.subr.mxu0 0.0
  %86 = vmatpush1.msra.mxu0 0.0
  %87 = vmatprep.subr.mxu0 0.0
  %88 = vmatpush1.msra.mxu0 0.0
  %89 = vmatprep.subr.mxu0 0.0
  %90 = vmatpush1.msra.mxu0 0.0
  %91 = vmatprep.subr.mxu0 0.0
  %92 = vmatpush1.msra.mxu0 0.0
  %93 = vmatprep.subr.mxu0 0.0
  %94 = vmatpush1.msra.mxu0 0.0
  %95 = vmatprep.subr.mxu0 0.0
  %96 = vmatpush1.msra.mxu0 0.0
  %97 = vmatprep.subr.mxu0 0.0
  %98 = vmatpush1.msra.mxu0 0.0
  %99 = vmatprep.subr.mxu0 0.0
  %100 = vmatpush1.msra.mxu0 0.0
  %101 = vmatprep.subr.mxu0 0.0
  %102 = vmatpush1.msra.mxu0 0.0
  %103 = vmatprep.subr.mxu0 0.0
  %104 = vmatpush1.msra.mxu0 0.0
  %105 = vmatprep.subr.mxu0 0.0
  %106 = vmatpush1.msra.mxu0 0.0
  %107 = vmatprep.subr.mxu0 0.0
  %108 = vmatpush1.msra.mxu0 0.0
  %109 = vmatprep.subr.mxu0 0.0
  %110 = vmatpush1.msra.mxu0 0.0
  %111 = vmatprep.subr.mxu0 0.0
  %112 = vmatpush1.msra.mxu0 0.0
  %113 = vmatprep.subr.mxu0 0.0
  %114 = vmatpush1.msra.mxu0 0.0
  %115 = vmatprep.subr.mxu0 0.0
  %116 = vmatpush1.msra.mxu0 0.0
  %117 = vmatprep.subr.mxu0 0.0
  %118 = vmatpush1.msra.mxu0 0.0
  %119 = vmatprep.subr.mxu0 0.0
  %120 = vmatpush1.msra.mxu0 0.0
  %121 = vmatprep.mubr.f32.mxu0 0.0
  %122 = vmatmul.mubr.f32.gmra.mrb[0].mxu0 %v34
  %v123 = vpop.f32.mrb[0].mxu0
  %v124 = vadd.f32 0.0, %v123
  %v125 = vpop.f32.mrb[0].mxu0
  %126 = vmatprep.mubr.f32.mxu0 0.0
  %127 = vmatmul.mubr.f32.gmra.mrb[0].mxu0 %v37
  %v128 = vpop.f32.mrb[0].mxu0
  %v129 = vadd.f32 0.0, %v128
  %v130 = vpop.f32.mrb[0].mxu0
  %131 = vmatprep.mubr.f32.mxu0 0.0
  %132 = vmatmul.mubr.f32.gmra.mrb[0].mxu0 %v40
  %v133 = vpop.f32.mrb[0].mxu0
  %v134 = vadd.f32 0.0, %v133
  %v135 = vpop.f32.mrb[0].mxu0
  %136 = vmatprep.mubr.f32.mxu0 0.0
  %137 = vmatmul.mubr.f32.gmra.mrb[0].mxu0 %v43
  %v138 = vpop.f32.mrb[0].mxu0
  %v139 = vadd.f32 0.0, %v138
  %v140 = vpop.f32.mrb[0].mxu0
  %141 = vmatprep.mubr.f32.mxu0 0.0
  %142 = vmatmul.mubr.f32.gmra.mrb[0].mxu0 %v46
  %v143 = vpop.f32.mrb[0].mxu0
  %v144 = vadd.f32 0.0, %v143
  %v145 = vpop.f32.mrb[0].mxu0
  %146 = vmatprep.mubr.f32.mxu0 0.0
  %147 = vmatmul.mubr.f32.gmra.mrb[0].mxu0 %v49
  %v148 = vpop.f32.mrb[0].mxu0
  %v149 = vadd.f32 0.0, %v148
  %v150 = vpop.f32.mrb[0].mxu0
  %151 = vmatprep.mubr.f32.mxu0 0.0
  %152 = vmatmul.mubr.f32.gmra.mrb[0].mxu0 %v52
  %v153 = vpop.f32.mrb[0].mxu0
  %v154 = vadd.f32 0.0, %v153
  %v155 = vpop.f32.mrb[0].mxu0
  %156 = vmatprep.mubr.f32.mxu0 0.0
  %157 = vmatmul.mubr.f32.gmra.mrb[0].mxu0 %v55
  %v158 = vpop.f32.mrb[0].mxu0
  %v159 = vadd.f32 0.0, %v158
  %v160 = vpop.f32.mrb[0].mxu0
  %161 = vdwg.mxu0
  %v162 = vlaneseq
  %v163 = vand.u32 %v162, 127
  %vm164 = vcmp.ge.s32.totalorder %v163, 64
  %vm165 = vcmp.lt.s32.totalorder %v163, 96
  %vm166 = vmand %vm164, %vm165
  %v167 = vtanh.pop %v124
  %v168 = vmul.f32 %v167, 0.5
  %v169 = vadd.f32 %v168, 0.5
  %v170 = vsel %vm166, %v167, %v169
  %v171 = vmul.f32 %v170, 0.0
  %173 = vrot.lane.b32.xlu0 %v170, 64
  %v174 = vpop.permute.xlu0 %173
  %v176 = vmul.f32 %v170, %v174
  %178 = vrot.lane.b32.xlu0 %v176, 32
  %v179 = vpop.permute.xlu0 %178
  %v181 = vadd.f32 %v171, %v179
  %v182 = vtanh.pop %v181
  %184 = vrot.lane.b32.xlu0 %v182, 64
  %v185 = vpop.permute.xlu0 %184
  %v187 = vmul.f32 %v170, %v185
  %v188 = vpack.c.bf16 %v187, %v187
  %190 = vrot.lane.b32.xlu0 %v188, 32
  %v191 = vpop.permute.xlu0 %190
  %v196 = vunpack.c.l.b16 %v18
  %v197 = vunpack.c.l.b16 %v19
  %v198 = vunpack.c.l.b16 %v20
  %v199 = vunpack.c.l.b16 %v21
  %v200 = vpack.c.b16 %v197, %v196
  %v201 = vpack.c.b16 %v199, %v198
  %vm204 = vcmask 261120
  %v206 = vsel %vm204, %v191, 0
  %208 = vmatprep.subr.bf16.mxu0 0
  %209 = vmatpush1.bf16.msra.mxu0 %v200
  %210 = vmatprep.subr.bf16.mxu0 0
  %211 = vmatpush1.bf16.msra.mxu0 %v201
  %212 = vmatprep.subr.bf16.mxu0 0
  %213 = vmatpush1.bf16.msra.mxu0 0
  %214 = vmatprep.subr.bf16.mxu0 0
  %215 = vmatpush1.bf16.msra.mxu0 0
  %216 = vmatprep.subr.bf16.mxu0 0
  %217 = vmatpush1.bf16.msra.mxu0 0
  %218 = vmatprep.subr.bf16.mxu0 0
  %219 = vmatpush1.bf16.msra.mxu0 0
  %220 = vmatprep.subr.bf16.mxu0 0
  %221 = vmatpush1.bf16.msra.mxu0 0
  %222 = vmatprep.subr.bf16.mxu0 0
  %223 = vmatpush1.bf16.msra.mxu0 0
  %224 = vmatprep.subr.bf16.mxu0 0
  %225 = vmatpush1.bf16.msra.mxu0 0
  %226 = vmatprep.subr.bf16.mxu0 0
  %227 = vmatpush1.bf16.msra.mxu0 0
  %228 = vmatprep.subr.bf16.mxu0 0
  %229 = vmatpush1.bf16.msra.mxu0 0
  %230 = vmatprep.subr.bf16.mxu0 0
  %231 = vmatpush1.bf16.msra.mxu0 0
  %232 = vmatprep.subr.bf16.mxu0 0
  %233 = vmatpush1.bf16.msra.mxu0 0
  %234 = vmatprep.subr.bf16.mxu0 0
  %235 = vmatpush1.bf16.msra.mxu0 0
  %236 = vmatprep.subr.bf16.mxu0 0
  %237 = vmatpush1.bf16.msra.mxu0 0
  %238 = vmatprep.subr.bf16.mxu0 0
  %239 = vmatpush1.bf16.msra.mxu0 0
  %240 = vmatprep.mubr.bf16.mxu0 0
  %241 = vmatmul.mubr.bf16.gmra.mrb[0].mxu0 %v206
  %v242 = vpop.f32.mrb[0].mxu0
  %v243 = vadd.f32 0.0, %v242
  %v244 = vpop.f32.mrb[0].mxu0
  %v245 = vpop.f32.mrb[0].mxu0
  %v246 = vpop.f32.mrb[0].mxu0
  %247 = vdwg.mxu0
  %v248 = vadd.f32 %v129, %v243
  %v249 = vtanh.pop %v248
  %v250 = vmul.f32 %v249, 0.5
  %v251 = vadd.f32 %v250, 0.5
  %v252 = vsel %vm166, %v249, %v251
  %v253 = vmul.f32 %v252, %v181
  %255 = vrot.lane.b32.xlu0 %v252, 64
  %v256 = vpop.permute.xlu0 %255
  %v258 = vmul.f32 %v252, %v256
  %260 = vrot.lane.b32.xlu0 %v258, 32
  %v261 = vpop.permute.xlu0 %260
  %v263 = vadd.f32 %v253, %v261
  %v264 = vtanh.pop %v263
  %266 = vrot.lane.b32.xlu0 %v264, 64
  %v267 = vpop.permute.xlu0 %266
  %v269 = vmul.f32 %v252, %v267
  %v270 = vpack.c.bf16 %v269, %v269
  %272 = vrot.lane.b32.xlu0 %v270, 32
  %v273 = vpop.permute.xlu0 %272
  %v275 = vsel %vm204, %v273, 0
  %277 = vmatprep.subr.bf16.mxu0 0
  %278 = vmatpush1.bf16.msra.mxu0 %v200
  %279 = vmatprep.subr.bf16.mxu0 0
  %280 = vmatpush1.bf16.msra.mxu0 %v201
  %281 = vmatprep.subr.bf16.mxu0 0
  %282 = vmatpush1.bf16.msra.mxu0 0
  %283 = vmatprep.subr.bf16.mxu0 0
  %284 = vmatpush1.bf16.msra.mxu0 0
  %285 = vmatprep.subr.bf16.mxu0 0
  %286 = vmatpush1.bf16.msra.mxu0 0
  %287 = vmatprep.subr.bf16.mxu0 0
  %288 = vmatpush1.bf16.msra.mxu0 0
  %289 = vmatprep.subr.bf16.mxu0 0
  %290 = vmatpush1.bf16.msra.mxu0 0
  %291 = vmatprep.subr.bf16.mxu0 0
  %292 = vmatpush1.bf16.msra.mxu0 0
  %293 = vmatprep.subr.bf16.mxu0 0
  %294 = vmatpush1.bf16.msra.mxu0 0
  %295 = vmatprep.subr.bf16.mxu0 0
  %296 = vmatpush1.bf16.msra.mxu0 0
  %297 = vmatprep.subr.bf16.mxu0 0
  %298 = vmatpush1.bf16.msra.mxu0 0
  %299 = vmatprep.subr.bf16.mxu0 0
  %300 = vmatpush1.bf16.msra.mxu0 0
  %301 = vmatprep.subr.bf16.mxu0 0
  %302 = vmatpush1.bf16.msra.mxu0 0
  %303 = vmatprep.subr.bf16.mxu0 0
  %304 = vmatpush1.bf16.msra.mxu0 0
  %305 = vmatprep.subr.bf16.mxu0 0
  %306 = vmatpush1.bf16.msra.mxu0 0
  %307 = vmatprep.subr.bf16.mxu0 0
  %308 = vmatpush1.bf16.msra.mxu0 0
  %309 = vmatprep.mubr.bf16.mxu0 0
  %310 = vmatmul.mubr.bf16.gmra.mrb[0].mxu0 %v275
  %v311 = vpop.f32.mrb[0].mxu0
  %v312 = vadd.f32 0.0, %v311
  %v313 = vpop.f32.mrb[0].mxu0
  %v314 = vpop.f32.mrb[0].mxu0
  %v315 = vpop.f32.mrb[0].mxu0
  %316 = vdwg.mxu0
  %v317 = vadd.f32 %v134, %v312
  %v318 = vtanh.pop %v317
  %v319 = vmul.f32 %v318, 0.5
  %v320 = vadd.f32 %v319, 0.5
  %v321 = vsel %vm166, %v318, %v320
  %v322 = vmul.f32 %v321, %v263
  %324 = vrot.lane.b32.xlu0 %v321, 64
  %v325 = vpop.permute.xlu0 %324
  %v327 = vmul.f32 %v321, %v325
  %329 = vrot.lane.b32.xlu0 %v327, 32
  %v330 = vpop.permute.xlu0 %329
  %v332 = vadd.f32 %v322, %v330
  %v333 = vtanh.pop %v332
  %335 = vrot.lane.b32.xlu0 %v333, 64
  %v336 = vpop.permute.xlu0 %335
  %v338 = vmul.f32 %v321, %v336
  %v339 = vpack.c.bf16 %v338, %v338
  %341 = vrot.lane.b32.xlu0 %v339, 32
  %v342 = vpop.permute.xlu0 %341
  %v344 = vsel %vm204, %v342, 0
  %346 = vmatprep.subr.bf16.mxu0 0
  %347 = vmatpush1.bf16.msra.mxu0 %v200
  %348 = vmatprep.subr.bf16.mxu0 0
  %349 = vmatpush1.bf16.msra.mxu0 %v201
  %350 = vmatprep.subr.bf16.mxu0 0
  %351 = vmatpush1.bf16.msra.mxu0 0
  %352 = vmatprep.subr.bf16.mxu0 0
  %353 = vmatpush1.bf16.msra.mxu0 0
  %354 = vmatprep.subr.bf16.mxu0 0
  %355 = vmatpush1.bf16.msra.mxu0 0
  %356 = vmatprep.subr.bf16.mxu0 0
  %357 = vmatpush1.bf16.msra.mxu0 0
  %358 = vmatprep.subr.bf16.mxu0 0
  %359 = vmatpush1.bf16.msra.mxu0 0
  %360 = vmatprep.subr.bf16.mxu0 0
  %361 = vmatpush1.bf16.msra.mxu0 0
  %362 = vmatprep.subr.bf16.mxu0 0
  %363 = vmatpush1.bf16.msra.mxu0 0
  %364 = vmatprep.subr.bf16.mxu0 0
  %365 = vmatpush1.bf16.msra.mxu0 0
  %366 = vmatprep.subr.bf16.mxu0 0
  %367 = vmatpush1.bf16.msra.mxu0 0
  %368 = vmatprep.subr.bf16.mxu0 0
  %369 = vmatpush1.bf16.msra.mxu0 0
  %370 = vmatprep.subr.bf16.mxu0 0
  %371 = vmatpush1.bf16.msra.mxu0 0
  %372 = vmatprep.subr.bf16.mxu0 0
  %373 = vmatpush1.bf16.msra.mxu0 0
  %374 = vmatprep.subr.bf16.mxu0 0
  %375 = vmatpush1.bf16.msra.mxu0 0
  %376 = vmatprep.subr.bf16.mxu0 0
  %377 = vmatpush1.bf16.msra.mxu0 0
  %378 = vmatprep.mubr.bf16.mxu0 0
  %379 = vmatmul.mubr.bf16.gmra.mrb[0].mxu0 %v344
  %v380 = vpop.f32.mrb[0].mxu0
  %v381 = vadd.f32 0.0, %v380
  %v382 = vpop.f32.mrb[0].mxu0
  %v383 = vpop.f32.mrb[0].mxu0
  %v384 = vpop.f32.mrb[0].mxu0
  %385 = vdwg.mxu0
  %v386 = vadd.f32 %v139, %v381
  %v387 = vtanh.pop %v386
  %v388 = vmul.f32 %v387, 0.5
  %v389 = vadd.f32 %v388, 0.5
  %v390 = vsel %vm166, %v387, %v389
  %v391 = vmul.f32 %v390, %v332
  %393 = vrot.lane.b32.xlu0 %v390, 64
  %v394 = vpop.permute.xlu0 %393
  %v396 = vmul.f32 %v390, %v394
  %398 = vrot.lane.b32.xlu0 %v396, 32
  %v399 = vpop.permute.xlu0 %398
  %v401 = vadd.f32 %v391, %v399
  %v402 = vtanh.pop %v401
  %404 = vrot.lane.b32.xlu0 %v402, 64
  %v405 = vpop.permute.xlu0 %404
  %v407 = vmul.f32 %v390, %v405
  %v408 = vpack.c.bf16 %v407, %v407
  %410 = vrot.lane.b32.xlu0 %v408, 32
  %v411 = vpop.permute.xlu0 %410
  %v413 = vsel %vm204, %v411, 0
  %415 = vmatprep.subr.bf16.mxu0 0
  %416 = vmatpush1.bf16.msra.mxu0 %v200
  %417 = vmatprep.subr.bf16.mxu0 0
  %418 = vmatpush1.bf16.msra.mxu0 %v201
  %419 = vmatprep.subr.bf16.mxu0 0
  %420 = vmatpush1.bf16.msra.mxu0 0
  %421 = vmatprep.subr.bf16.mxu0 0
  %422 = vmatpush1.bf16.msra.mxu0 0
  %423 = vmatprep.subr.bf16.mxu0 0
  %424 = vmatpush1.bf16.msra.mxu0 0
  %425 = vmatprep.subr.bf16.mxu0 0
  %426 = vmatpush1.bf16.msra.mxu0 0
  %427 = vmatprep.subr.bf16.mxu0 0
  %428 = vmatpush1.bf16.msra.mxu0 0
  %429 = vmatprep.subr.bf16.mxu0 0
  %430 = vmatpush1.bf16.msra.mxu0 0
  %431 = vmatprep.subr.bf16.mxu0 0
  %432 = vmatpush1.bf16.msra.mxu0 0
  %433 = vmatprep.subr.bf16.mxu0 0
  %434 = vmatpush1.bf16.msra.mxu0 0
  %435 = vmatprep.subr.bf16.mxu0 0
  %436 = vmatpush1.bf16.msra.mxu0 0
  %437 = vmatprep.subr.bf16.mxu0 0
  %438 = vmatpush1.bf16.msra.mxu0 0
  %439 = vmatprep.subr.bf16.mxu0 0
  %440 = vmatpush1.bf16.msra.mxu0 0
  %441 = vmatprep.subr.bf16.mxu0 0
  %442 = vmatpush1.bf16.msra.mxu0 0
  %443 = vmatprep.subr.bf16.mxu0 0
  %444 = vmatpush1.bf16.msra.mxu0 0
  %445 = vmatprep.subr.bf16.mxu0 0
  %446 = vmatpush1.bf16.msra.mxu0 0
  %447 = vmatprep.mubr.bf16.mxu0 0
  %448 = vmatmul.mubr.bf16.gmra.mrb[0].mxu0 %v413
  %v449 = vpop.f32.mrb[0].mxu0
  %v450 = vadd.f32 0.0, %v449
  %v451 = vpop.f32.mrb[0].mxu0
  %v452 = vpop.f32.mrb[0].mxu0
  %v453 = vpop.f32.mrb[0].mxu0
  %454 = vdwg.mxu0
  %v455 = vadd.f32 %v144, %v450
  %v456 = vtanh.pop %v455
  %v457 = vmul.f32 %v456, 0.5
  %v458 = vadd.f32 %v457, 0.5
  %v459 = vsel %vm166, %v456, %v458
  %v460 = vmul.f32 %v459, %v401
  %462 = vrot.lane.b32.xlu0 %v459, 64
  %v463 = vpop.permute.xlu0 %462
  %v465 = vmul.f32 %v459, %v463
  %467 = vrot.lane.b32.xlu0 %v465, 32
  %v468 = vpop.permute.xlu0 %467
  %v470 = vadd.f32 %v460, %v468
  %v471 = vtanh.pop %v470
  %473 = vrot.lane.b32.xlu0 %v471, 64
  %v474 = vpop.permute.xlu0 %473
  %v476 = vmul.f32 %v459, %v474
  %v477 = vpack.c.bf16 %v476, %v476
  %479 = vrot.lane.b32.xlu0 %v477, 32
  %v480 = vpop.permute.xlu0 %479
  %v482 = vsel %vm204, %v480, 0
  %484 = vmatprep.subr.bf16.mxu0 0
  %485 = vmatpush1.bf16.msra.mxu0 %v200
  %486 = vmatprep.subr.bf16.mxu0 0
  %487 = vmatpush1.bf16.msra.mxu0 %v201
  %488 = vmatprep.subr.bf16.mxu0 0
  %489 = vmatpush1.bf16.msra.mxu0 0
  %490 = vmatprep.subr.bf16.mxu0 0
  %491 = vmatpush1.bf16.msra.mxu0 0
  %492 = vmatprep.subr.bf16.mxu0 0
  %493 = vmatpush1.bf16.msra.mxu0 0
  %494 = vmatprep.subr.bf16.mxu0 0
  %495 = vmatpush1.bf16.msra.mxu0 0
  %496 = vmatprep.subr.bf16.mxu0 0
  %497 = vmatpush1.bf16.msra.mxu0 0
  %498 = vmatprep.subr.bf16.mxu0 0
  %499 = vmatpush1.bf16.msra.mxu0 0
  %500 = vmatprep.subr.bf16.mxu0 0
  %501 = vmatpush1.bf16.msra.mxu0 0
  %502 = vmatprep.subr.bf16.mxu0 0
  %503 = vmatpush1.bf16.msra.mxu0 0
  %504 = vmatprep.subr.bf16.mxu0 0
  %505 = vmatpush1.bf16.msra.mxu0 0
  %506 = vmatprep.subr.bf16.mxu0 0
  %507 = vmatpush1.bf16.msra.mxu0 0
  %508 = vmatprep.subr.bf16.mxu0 0
  %509 = vmatpush1.bf16.msra.mxu0 0
  %510 = vmatprep.subr.bf16.mxu0 0
  %511 = vmatpush1.bf16.msra.mxu0 0
  %512 = vmatprep.subr.bf16.mxu0 0
  %513 = vmatpush1.bf16.msra.mxu0 0
  %514 = vmatprep.subr.bf16.mxu0 0
  %515 = vmatpush1.bf16.msra.mxu0 0
  %516 = vmatprep.mubr.bf16.mxu0 0
  %517 = vmatmul.mubr.bf16.gmra.mrb[0].mxu0 %v482
  %v518 = vpop.f32.mrb[0].mxu0
  %v519 = vadd.f32 0.0, %v518
  %v520 = vpop.f32.mrb[0].mxu0
  %v521 = vpop.f32.mrb[0].mxu0
  %v522 = vpop.f32.mrb[0].mxu0
  %523 = vdwg.mxu0
  %v524 = vadd.f32 %v149, %v519
  %v525 = vtanh.pop %v524
  %v526 = vmul.f32 %v525, 0.5
  %v527 = vadd.f32 %v526, 0.5
  %v528 = vsel %vm166, %v525, %v527
  %v529 = vmul.f32 %v528, %v470
  %531 = vrot.lane.b32.xlu0 %v528, 64
  %v532 = vpop.permute.xlu0 %531
  %v534 = vmul.f32 %v528, %v532
  %536 = vrot.lane.b32.xlu0 %v534, 32
  %v537 = vpop.permute.xlu0 %536
  %v539 = vadd.f32 %v529, %v537
  %v540 = vtanh.pop %v539
  %542 = vrot.lane.b32.xlu0 %v540, 64
  %v543 = vpop.permute.xlu0 %542
  %v545 = vmul.f32 %v528, %v543
  %v546 = vpack.c.bf16 %v545, %v545
  %548 = vrot.lane.b32.xlu0 %v546, 32
  %v549 = vpop.permute.xlu0 %548
  %v551 = vsel %vm204, %v549, 0
  %553 = vmatprep.subr.bf16.mxu0 0
  %554 = vmatpush1.bf16.msra.mxu0 %v200
  %555 = vmatprep.subr.bf16.mxu0 0
  %556 = vmatpush1.bf16.msra.mxu0 %v201
  %557 = vmatprep.subr.bf16.mxu0 0
  %558 = vmatpush1.bf16.msra.mxu0 0
  %559 = vmatprep.subr.bf16.mxu0 0
  %560 = vmatpush1.bf16.msra.mxu0 0
  %561 = vmatprep.subr.bf16.mxu0 0
  %562 = vmatpush1.bf16.msra.mxu0 0
  %563 = vmatprep.subr.bf16.mxu0 0
  %564 = vmatpush1.bf16.msra.mxu0 0
  %565 = vmatprep.subr.bf16.mxu0 0
  %566 = vmatpush1.bf16.msra.mxu0 0
  %567 = vmatprep.subr.bf16.mxu0 0
  %568 = vmatpush1.bf16.msra.mxu0 0
  %569 = vmatprep.subr.bf16.mxu0 0
  %570 = vmatpush1.bf16.msra.mxu0 0
  %571 = vmatprep.subr.bf16.mxu0 0
  %572 = vmatpush1.bf16.msra.mxu0 0
  %573 = vmatprep.subr.bf16.mxu0 0
  %574 = vmatpush1.bf16.msra.mxu0 0
  %575 = vmatprep.subr.bf16.mxu0 0
  %576 = vmatpush1.bf16.msra.mxu0 0
  %577 = vmatprep.subr.bf16.mxu0 0
  %578 = vmatpush1.bf16.msra.mxu0 0
  %579 = vmatprep.subr.bf16.mxu0 0
  %580 = vmatpush1.bf16.msra.mxu0 0
  %581 = vmatprep.subr.bf16.mxu0 0
  %582 = vmatpush1.bf16.msra.mxu0 0
  %583 = vmatprep.subr.bf16.mxu0 0
  %584 = vmatpush1.bf16.msra.mxu0 0
  %585 = vmatprep.mubr.bf16.mxu0 0
  %586 = vmatmul.mubr.bf16.gmra.mrb[0].mxu0 %v551
  %v587 = vpop.f32.mrb[0].mxu0
  %v588 = vadd.f32 0.0, %v587
  %v589 = vpop.f32.mrb[0].mxu0
  %v590 = vpop.f32.mrb[0].mxu0
  %v591 = vpop.f32.mrb[0].mxu0
  %592 = vdwg.mxu0
  %v593 = vadd.f32 %v154, %v588
  %v594 = vtanh.pop %v593
  %v595 = vmul.f32 %v594, 0.5
  %v596 = vadd.f32 %v595, 0.5
  %v597 = vsel %vm166, %v594, %v596
  %v598 = vmul.f32 %v597, %v539
  %600 = vrot.lane.b32.xlu0 %v597, 64
  %v601 = vpop.permute.xlu0 %600
  %v603 = vmul.f32 %v597, %v601
  %605 = vrot.lane.b32.xlu0 %v603, 32
  %v606 = vpop.permute.xlu0 %605
  %v608 = vadd.f32 %v598, %v606
  %v609 = vtanh.pop %v608
  %611 = vrot.lane.b32.xlu0 %v609, 64
  %v612 = vpop.permute.xlu0 %611
  %v614 = vmul.f32 %v597, %v612
  %v615 = vpack.c.bf16 %v614, %v614
  %617 = vrot.lane.b32.xlu0 %v615, 32
  %v618 = vpop.permute.xlu0 %617
  %v620 = vsel %vm204, %v618, 0
  %622 = vmatprep.subr.bf16.mxu0 0
  %623 = vmatpush1.bf16.msra.mxu0 %v200
  %624 = vmatprep.subr.bf16.mxu0 0
  %625 = vmatpush1.bf16.msra.mxu0 %v201
  %626 = vmatprep.subr.bf16.mxu0 0
  %627 = vmatpush1.bf16.msra.mxu0 0
  %628 = vmatprep.subr.bf16.mxu0 0
  %629 = vmatpush1.bf16.msra.mxu0 0
  %630 = vmatprep.subr.bf16.mxu0 0
  %631 = vmatpush1.bf16.msra.mxu0 0
  %632 = vmatprep.subr.bf16.mxu0 0
  %633 = vmatpush1.bf16.msra.mxu0 0
  %634 = vmatprep.subr.bf16.mxu0 0
  %635 = vmatpush1.bf16.msra.mxu0 0
  %636 = vmatprep.subr.bf16.mxu0 0
  %637 = vmatpush1.bf16.msra.mxu0 0
  %638 = vmatprep.subr.bf16.mxu0 0
  %639 = vmatpush1.bf16.msra.mxu0 0
  %640 = vmatprep.subr.bf16.mxu0 0
  %641 = vmatpush1.bf16.msra.mxu0 0
  %642 = vmatprep.subr.bf16.mxu0 0
  %643 = vmatpush1.bf16.msra.mxu0 0
  %644 = vmatprep.subr.bf16.mxu0 0
  %645 = vmatpush1.bf16.msra.mxu0 0
  %646 = vmatprep.subr.bf16.mxu0 0
  %647 = vmatpush1.bf16.msra.mxu0 0
  %648 = vmatprep.subr.bf16.mxu0 0
  %649 = vmatpush1.bf16.msra.mxu0 0
  %650 = vmatprep.subr.bf16.mxu0 0
  %651 = vmatpush1.bf16.msra.mxu0 0
  %652 = vmatprep.subr.bf16.mxu0 0
  %653 = vmatpush1.bf16.msra.mxu0 0
  %654 = vmatprep.mubr.bf16.mxu0 0
  %655 = vmatmul.mubr.bf16.gmra.mrb[0].mxu0 %v620
  %v656 = vpop.f32.mrb[0].mxu0
  %v657 = vadd.f32 0.0, %v656
  %v658 = vpop.f32.mrb[0].mxu0
  %v659 = vpop.f32.mrb[0].mxu0
  %v660 = vpop.f32.mrb[0].mxu0
  %661 = vdwg.mxu0
  %v662 = vadd.f32 %v159, %v657
  %v663 = vtanh.pop %v662
  %v664 = vmul.f32 %v663, 0.5
  %v665 = vadd.f32 %v664, 0.5
  %v666 = vsel %vm166, %v663, %v665
  %v667 = vmul.f32 %v666, %v608
  %669 = vrot.lane.b32.xlu0 %v666, 64
  %v670 = vpop.permute.xlu0 %669
  %v672 = vmul.f32 %v666, %v670
  %674 = vrot.lane.b32.xlu0 %v672, 32
  %v675 = vpop.permute.xlu0 %674
  %v677 = vadd.f32 %v667, %v675
  %v678 = vtanh.pop %v677
  %680 = vrot.lane.b32.xlu0 %v678, 64
  %v681 = vpop.permute.xlu0 %680
  %v683 = vmul.f32 %v666, %v681
  %v684 = vld [vmem:[%s3] sm:$0xff]
  %v685 = vld [vmem:[%s3 + $0x8] sm:$0xff]
  %v686 = vld [vmem:[%s3 + $0x10] sm:$0xff]
  %v687 = vld [vmem:[%s3 + $0x18] sm:$0xff]
  %v688 = vld [vmem:[%s3 + $0x20] sm:$0x1]
  %v689 = vlaneseq
  %v690 = vshrl.u32 %v689, 7
  %v691 = vsub.s32 0, %v690
  %v692 = vrot.slane %v688, %v691
  %694 = vrot.lane.b32.xlu0 %v683, 32
  %v695 = vpop.permute.xlu0 %694
  %v696 = vsel %vm204, %v695, 0
  %698 = vmatprep.subr.mxu0 0.0
  %699 = vmatpush1.msra.mxu0 %v684
  %700 = vmatprep.subr.mxu0 0.0
  %701 = vmatpush1.msra.mxu0 %v685
  %702 = vmatprep.subr.mxu0 0.0
  %703 = vmatpush1.msra.mxu0 %v686
  %704 = vmatprep.subr.mxu0 0.0
  %705 = vmatpush1.msra.mxu0 %v687
  %706 = vmatprep.subr.mxu0 0.0
  %707 = vmatpush1.msra.mxu0 0.0
  %708 = vmatprep.subr.mxu0 0.0
  %709 = vmatpush1.msra.mxu0 0.0
  %710 = vmatprep.subr.mxu0 0.0
  %711 = vmatpush1.msra.mxu0 0.0
  %712 = vmatprep.subr.mxu0 0.0
  %713 = vmatpush1.msra.mxu0 0.0
  %714 = vmatprep.subr.mxu0 0.0
  %715 = vmatpush1.msra.mxu0 0.0
  %716 = vmatprep.subr.mxu0 0.0
  %717 = vmatpush1.msra.mxu0 0.0
  %718 = vmatprep.subr.mxu0 0.0
  %719 = vmatpush1.msra.mxu0 0.0
  %720 = vmatprep.subr.mxu0 0.0
  %721 = vmatpush1.msra.mxu0 0.0
  %722 = vmatprep.subr.mxu0 0.0
  %723 = vmatpush1.msra.mxu0 0.0
  %724 = vmatprep.subr.mxu0 0.0
  %725 = vmatpush1.msra.mxu0 0.0
  %726 = vmatprep.subr.mxu0 0.0
  %727 = vmatpush1.msra.mxu0 0.0
  %728 = vmatprep.subr.mxu0 0.0
  %729 = vmatpush1.msra.mxu0 0.0
  %730 = vmatprep.subr.mxu0 0.0
  %731 = vmatpush1.msra.mxu0 0.0
  %732 = vmatprep.subr.mxu0 0.0
  %733 = vmatpush1.msra.mxu0 0.0
  %734 = vmatprep.subr.mxu0 0.0
  %735 = vmatpush1.msra.mxu0 0.0
  %736 = vmatprep.subr.mxu0 0.0
  %737 = vmatpush1.msra.mxu0 0.0
  %738 = vmatprep.subr.mxu0 0.0
  %739 = vmatpush1.msra.mxu0 0.0
  %740 = vmatprep.subr.mxu0 0.0
  %741 = vmatpush1.msra.mxu0 0.0
  %742 = vmatprep.subr.mxu0 0.0
  %743 = vmatpush1.msra.mxu0 0.0
  %744 = vmatprep.subr.mxu0 0.0
  %745 = vmatpush1.msra.mxu0 0.0
  %746 = vmatprep.subr.mxu0 0.0
  %747 = vmatpush1.msra.mxu0 0.0
  %748 = vmatprep.subr.mxu0 0.0
  %749 = vmatpush1.msra.mxu0 0.0
  %750 = vmatprep.subr.mxu0 0.0
  %751 = vmatpush1.msra.mxu0 0.0
  %752 = vmatprep.subr.mxu0 0.0
  %753 = vmatpush1.msra.mxu0 0.0
  %754 = vmatprep.subr.mxu0 0.0
  %755 = vmatpush1.msra.mxu0 0.0
  %756 = vmatprep.subr.mxu0 0.0
  %757 = vmatpush1.msra.mxu0 0.0
  %758 = vmatprep.subr.mxu0 0.0
  %759 = vmatpush1.msra.mxu0 0.0
  %760 = vmatprep.subr.mxu0 0.0
  %761 = vmatpush1.msra.mxu0 0.0
  %762 = vmatprep.mubr.f32.mxu0 0.0
  %763 = vmatmul.mubr.f32.gmra.mrb[0].mxu0 %v696
  %v764 = vpop.f32.mrb[0].mxu0
  %v765 = vadd.f32 %v692, %v764
  %v766 = vpop.f32.mrb[0].mxu0
  %767 = vdwg.mxu0
  %vm768 = vcmask 7168
  %769 = vst.msk [vmem:[%s4] sm:$0xff] %vm768, %v765
  // Predicated region
  $region18: #{tpu_custom_call.1} parent=0 // pred_check
    _
  $region19: #{tpu_custom_call.1} parent=0 // pred_check_branch
    %771 = sbr.rel (0) target = $region21
  $region20: #{tpu_custom_call.1} parent=0 // pred_region
    _
  $region21: #{tpu_custom_call.1} parent=0 // pred_fallthru
    _
  // Predicated region
  $region22: #{tpu_custom_call.1} parent=0 // pred_check
    _
  $region23: #{tpu_custom_call.1} parent=0 // pred_check_branch
    %773 = sbr.rel (0) target = $region25
  $region24: #{tpu_custom_call.1} parent=0 // pred_region
    _
  $region25: #{tpu_custom_call.1} parent=0 // pred_fallthru
    _

</llo_original>
